<compile_context>
chip_gen: v7x
topology: tpu7x:2x2x1
jax: 0.10.0
libtpu: 0.0.40
codegen_flags: <defaults>
</compile_context>

<pallas_src>
import jax
import jax.numpy as jnp
from jax.experimental import pallas as pl
from jax.experimental.pallas import tpu as pltpu


_LANE_CANDIDATES = (4096, 2048, 1024, 512, 256, 128)
_TARGET_TILE_BYTES = 8 << 20   # ~8 MiB of HBM-dtype bytes per tile
_MAX_TILE_ELEMS = 2 << 20      # cap f32 working set per tile at ~8 MiB (2M elems)
_VMEM_FLOOR = 32 << 20
_VMEM_CEIL = 48 << 20          # stays well under v7x's 64 MiB physical VMEM


def _swishx_kernel(max_ref, x_ref, o_ref):
    # max_ref: (1,) f32 scalar in SMEM.
    # x_ref / o_ref: tiles in VMEM (original dtype), rank 1 or 2.
    x = x_ref[...].astype(jnp.float32)     # f32 compute: required on v5e, hidden under DMA elsewhere
    maximal = max_ref[0]
    swish = x * jax.nn.sigmoid(x)          # sigmoid -> EUP, mul -> VPU (mem-bound, stays hidden)
    # min(swish - maximal, 0) + maximal  ==  min(swish, maximal)  (incl. NaN propagation)
    o_ref[...] = jnp.minimum(swish, maximal).astype(o_ref.dtype)


def _budget_elems(itemsize: int) -> int:
    """Elements per tile: ~8 MiB of HBM bytes, capped by the f32 working set."""
    return max(1024, min(_TARGET_TILE_BYTES // itemsize, _MAX_TILE_ELEMS))


def _vmem_limit(block_elems: int, itemsize: int) -> int:
    io_bytes = block_elems * itemsize      # one HBM-dtype tile (in or out)
    f32_bytes = block_elems * 4            # f32 working copy / upcast temporaries
    need = 4 * io_bytes + 2 * f32_bytes + (4 << 20)   # 2x-buffered in + out, + headroom
    return int(min(max(need, _VMEM_FLOOR), _VMEM_CEIL))


def swishx(x: jax.Array, maximal: jax.Array) -> jax.Array:
    """Apply SwishX elementwise. `x` is any shape/float dtype; `maximal` is the learned cap."""
    orig_shape = x.shape
    dtype = x.dtype
    itemsize = jnp.dtype(dtype).itemsize
    maximal = jnp.asarray(maximal, jnp.float32).reshape(-1)[:1]   # defensively (1,)

    flat = x.reshape(-1)
    n = flat.shape[0]
    if n == 0:
        return x

    lane = next((c for c in _LANE_CANDIDATES if n % c == 0), None)

    if lane is not None:
        # Aligned fast path: lane-dense 2-D slab -> wide unmasked stores.
        rows = n // lane
        kernel_in = flat.reshape(rows, lane)
        if rows <= 8:
            block_rows = rows                      # block == full array dims is allowed
        else:
            block_rows = max(8, (_budget_elems(itemsize) // lane // 8) * 8)
            # Keep >= 2 grid steps whenever possible so v7x megacore can shard the axis.
            block_rows = min(block_rows, max(8, pl.cdiv(pl.cdiv(rows, 2), 8) * 8))
        block_shape = (block_rows, lane)
        grid = (pl.cdiv(rows, block_rows),)
        index_map = lambda i: (i, 0)
        out_shape = jax.ShapeDtypeStruct((rows, lane), dtype)
    else:
        # Ragged path: keep the array 1-D.  Pallas masks the partial trailing
        # block, so there is no host-side pad / slice (no extra HBM round trips).
        if n <= 1024:
            block_elems = n                        # block == full array dim is allowed
        else:
            block_elems = (_budget_elems(itemsize) // 1024) * 1024     # multiple of 8*128
            block_elems = min(block_elems, max(1024, pl.cdiv(pl.cdiv(n, 2), 1024) * 1024))
        kernel_in = flat
        block_shape = (block_elems,)
        grid = (pl.cdiv(n, block_elems),)
        index_map = lambda i: (i,)
        out_shape = jax.ShapeDtypeStruct((n,), dtype)

    block_total = 1
    for b in block_shape:
        block_total *= int(b)

    out = pl.pallas_call(
        _swishx_kernel,
        out_shape=out_shape,
        grid=grid,
        in_specs=[
            pl.BlockSpec(memory_space=pltpu.SMEM),        # maximal (1,) scalar
            pl.BlockSpec(block_shape, index_map),         # x tile
        ],
        out_specs=pl.BlockSpec(block_shape, index_map),
        compiler_params=pltpu.CompilerParams(
            dimension_semantics=("parallel",),            # lets v7x shard across its 2 TCs
            vmem_limit_bytes=_vmem_limit(block_total, itemsize),
        ),
        cost_estimate=pl.CostEstimate(
            flops=4 * n,
            transcendentals=n,
            bytes_accessed=2 * n * itemsize,
        ),
    )(maximal, kernel_in)

    return out.reshape(orig_shape)


def swishx_reference(x, maximal):
    xf = x.astype(jnp.float32)
    m = jnp.asarray(maximal, jnp.float32).reshape(-1)[0]
    out = xf * jax.nn.sigmoid(xf)
    out = jnp.minimum(out - m, 0.0) + m
    return out.astype(x.dtype)


if __name__ == "__main__":
    key = jax.random.PRNGKey(0)
    # Deterministic parameter init (matches nn.Parameter(FloatTensor([2.72]))).
    maximal = jnp.array([2.72], dtype=jnp.float32)

    # 1) NCHW input, like the PyTorch module would see from a conv stack.
    k0, k1, k2 = jax.random.split(key, 3)
    x = jax.random.normal(k0, (2, 4, 16, 16), dtype=jnp.float32) * 3.0
    out = jax.block_until_ready(swishx(x, maximal))
    ref = swishx_reference(x, maximal)
    assert out.shape == x.shape and out.dtype == x.dtype
    assert jnp.allclose(out, ref, atol=1e-6, rtol=1e-6)

    # 2) Ragged (non-128-aligned) size exercises the pad-free 1-D path.
    x_ragged = jax.random.normal(k1, (2, 3, 7, 5), dtype=jnp.float32) * 3.0
    out_r = jax.block_until_ready(swishx(x_ragged, maximal))
    ref_r = swishx_reference(x_ragged, maximal)
    assert out_r.shape == x_ragged.shape
    assert jnp.allclose(out_r, ref_r, atol=1e-6, rtol=1e-6)

    # 3) bf16 path: HBM stays bf16, compute in f32 inside the kernel.
    x_bf16 = (jax.random.normal(k2, (2, 4, 16, 16), dtype=jnp.float32) * 3.0
              ).astype(jnp.bfloat16)
    out_b = jax.block_until_ready(swishx(x_bf16, maximal))
    ref_b = swishx_reference(x_bf16, maximal)
    assert out_b.dtype == jnp.bfloat16
    assert jnp.allclose(out_b.astype(jnp.float32), ref_b.astype(jnp.float32),
                        atol=2e-2, rtol=2e-2)

    # 4) 0-d maximal must also work (defensive reshape in the wrapper).
    out_s = jax.block_until_ready(swishx(x, jnp.float32(2.72)))
    assert jnp.allclose(out_s, ref, atol=1e-6, rtol=1e-6)

    print("KERNEL_OK")
</pallas_src>

<mosaic_0001>
module attributes {stable_mosaic.version = 11 : i64} {
  func.func @_swishx_kernel(%arg0: i32, %arg1: memref<1xf32, #tpu.memory_space<smem>>, %arg2: memref<1x2048xf32, #tpu.memory_space<vmem>>, %arg3: memref<1x2048xf32, #tpu.memory_space<vmem>>) attributes {dimension_semantics = [#tpu.dimension_semantics<parallel>], iteration_bounds = array<i64: 1>, scalar_prefetch = 0 : i64, scratch_operands = 0 : i64, tpu.core_type = #tpu.core_type<tc>, window_params = [{transform_indices = @transform_0, window_bounds = array<i64: 1>}, {transform_indices = @transform_1, window_bounds = array<i64: 1, 2048>}, {transform_indices = @transform_2, window_bounds = array<i64: 1, 2048>}]} {
    %c0 = arith.constant 0 : index
    %c0_0 = arith.constant 0 : index
    %0 = vector.load %arg2[%c0, %c0_0] : memref<1x2048xf32, #tpu.memory_space<vmem>>, vector<1x2048xf32>
    %c0_1 = arith.constant 0 : index
    %1 = memref.load %arg1[%c0_1] : memref<1xf32, #tpu.memory_space<smem>>
    %2 = arith.negf %0 : vector<1x2048xf32>
    %3 = math.exp %2 : vector<1x2048xf32>
    %cst = arith.constant 1.000000e+00 : f32
    %4 = vector.broadcast %cst : f32 to vector<1x2048xf32>
    %5 = arith.addf %4, %3 : vector<1x2048xf32>
    %6 = arith.divf %4, %5 : vector<1x2048xf32>
    %7 = arith.mulf %0, %6 : vector<1x2048xf32>
    %8 = vector.broadcast %1 : f32 to vector<1x2048xf32>
    %9 = arith.minimumf %7, %8 : vector<1x2048xf32>
    %c0_2 = arith.constant 0 : index
    %c0_3 = arith.constant 0 : index
    %10 = vector.load %arg3[%c0_2, %c0_3] : memref<1x2048xf32, #tpu.memory_space<vmem>>, vector<1x2048xf32>
    tpu.vector_store %arg3[%c0_2, %c0_3], %9 {strides = array<i32>} : memref<1x2048xf32, #tpu.memory_space<vmem>>, vector<1x2048xf32>,
    return
  }
  func.func @transform_0(%arg0: i32) -> i32 {
    %c0_i32 = arith.constant 0 : i32
    %c0_i32_0 = arith.constant 0 : i32
    return %c0_i32 : i32
  }
  func.func @transform_1(%arg0: i32) -> (i32, i32) {
    %c0_i32 = arith.constant 0 : i32
    %c0_i32_0 = arith.constant 0 : i32
    return %arg0, %c0_i32 : i32, i32
  }
  func.func @transform_2(%arg0: i32) -> (i32, i32) {
    %c0_i32 = arith.constant 0 : i32
    %c0_i32_0 = arith.constant 0 : i32
    return %arg0, %c0_i32 : i32, i32
  }
}

</mosaic_0001>

<llo_original>
// kernel: tpu_custom_call.1
$region0: #{tpu_custom_call.1}
  #allocation0 [shape = 'u32[]', space=smem, size = 0x4, offset = 0x4, fixed_abs, tag = 'smem constant byte address 0x4 - core index']
  #allocation1 [shape = 'u32[144,128]{1,0:T(1,128)}', space=vmem, size = 0x12000, scoped, tag = 'internal scratch']
  #allocation2 [shape = 'f32[1]{0:T(128)S(6)}', space=smem, size = 0x200, scoped, tag = 'scoped memory for tpu_custom_call.1']
  %s0 = inlined_call_operand.<no memory space> [shape: f32[1], index: 0, kind: input, shape index: {}]
  %s1 = inlined_call_operand.hbm [shape: f32[1,2048], index: 1, kind: input, shape index: {}]
  %s2 = inlined_call_operand.hbm [shape: f32[1,2048], index: 2, kind: output, shape index: {}]
  %s3 = sld [smem:[#allocation0]]
  $region22: #{tpu_custom_call.1} parent=0
    _
  %s5 = ssub.s32 1, %s3
  %s6 = scalar_select 0, %s5, %s3
  %7 = sst [smem:[#allocation2]] %s0
  $region1: #{tpu_custom_call.1} parent=0
    #allocation3 [shape = 'u8[8192]{0}', space=vmem, size = 0x2000, scoped, tag = 'input window, operand 1, single buffered']
    #allocation4 [shape = 's32[1]{0}', space=sflag, size = 0x4, scoped, tag = 'scoped memory for tpu_custom_call.1']
    #allocation5 [shape = 's32[1]{0}', space=sflag, size = 0x4, scoped, tag = 'scoped memory for tpu_custom_call.1']
    #allocation6 [shape = 'u8[8192]{0}', space=vmem, size = 0x2000, scoped, tag = 'output window, operand 0, single buffered']
    %8 = vsyncpa [#allocation4], 0
    %9 = vsyncpa [#allocation5], 0
    // Predicated region
    $region2: #{tpu_custom_call.1} parent=1 // pred_check
      _
    $region3: #{tpu_custom_call.1} parent=1 // pred_check_branch
      %11 = sbr.rel (0) target = $region5
    $region4: #{tpu_custom_call.1} parent=1 // pred_region
      _
    $region5: #{tpu_custom_call.1} parent=1 // pred_fallthru
      _
    // Predicated region
    $region6: #{tpu_custom_call.1} parent=1 // pred_check
      _
    $region7: #{tpu_custom_call.1} parent=1 // pred_check_branch
      %13 = sbr.rel (0) target = $region9
    $region8: #{tpu_custom_call.1} parent=1 // pred_region
      %s15 = ssub.s32 256, 256
      %16 = vsyncadd [#allocation4], %s15
      %s18 = sshll.u32 [#allocation3], 4
      %s19 = int_to_ptr.vmem [resolvable:$true] %s18
      %21 = dma.hbm_to_vmem [thread:$0]  %s1, 256, %s19, [#allocation4]
    $region9: #{tpu_custom_call.1} parent=1 // pred_fallthru
      _
    // Predicated region
    $region10: #{tpu_custom_call.1} parent=1 // pred_check
      _
    $region11: #{tpu_custom_call.1} parent=1 // pred_check_branch
      %23 = sbr.rel (0) target = $region13
    $region12: #{tpu_custom_call.1} parent=1 // pred_region
      %24 = dma.done [#allocation4], 256
    $region13: #{tpu_custom_call.1} parent=1 // pred_fallthru
      _
    %v25 = vld [vmem:[#allocation3] sm:$0xff]
    %v26 = vld [vmem:[#allocation3 + $0x8] sm:$0xff]
    %s27 = sld [smem:[#allocation2]]
    %v28 = vxor.u32 %v25, 2147483648
    %v29 = vxor.u32 %v26, 2147483648
    %v30 = vmul.f32 %v28, 1.442695
    %v31 = vpow.pop %v30
    %v32 = vmul.f32 %v29, 1.442695
    %v33 = vpow.pop %v32
    %v34 = vadd.f32 %v31, 1.0
    %v35 = vadd.f32 %v33, 1.0
    %v36 = vrcp.pop %v34
    %v37 = vmul.f32 1.0, %v36
    %v38 = vrcp.pop %v35
    %v39 = vmul.f32 1.0, %v38
    %v40 = vmul.f32 %v25, %v37
    %v41 = vmul.f32 %v26, %v39
    %v42 = vstv %s27
    %v43 = vmin.f32 %v40, %v42
    %v44 = vmin.f32 %v41, %v42
    %45 = vst [vmem:[#allocation6] sm:$0xff] %v43
    %46 = vst [vmem:[#allocation6 + $0x8] sm:$0xff] %v44
    // Predicated region
    $region14: #{tpu_custom_call.1} parent=1 // pred_check
      _
    $region15: #{tpu_custom_call.1} parent=1 // pred_check_branch
      %48 = sbr.rel (0) target = $region17
    $region16: #{tpu_custom_call.1} parent=1 // pred_region
      %s50 = ssub.s32 256, 256
      %51 = vsyncadd [#allocation5], %s50
      %s53 = sshll.u32 [#allocation6], 4
      %s54 = int_to_ptr.vmem [resolvable:$true] %s53
      %56 = dma.vmem_to_hbm [thread:$0]  %s54, 256, %s2, [#allocation5]
    $region17: #{tpu_custom_call.1} parent=1 // pred_fallthru
      _
    // Predicated region
    $region18: #{tpu_custom_call.1} parent=1 // pred_check
      _
    $region19: #{tpu_custom_call.1} parent=1 // pred_check_branch
      %58 = sbr.rel (0) target = $region21
    $region20: #{tpu_custom_call.1} parent=1 // pred_region
      %59 = dma.done [#allocation5], 256
    $region21: #{tpu_custom_call.1} parent=1 // pred_fallthru
      _
    %60 = vsyncpa [#allocation4], 1
    %61 = vsyncpa [#allocation5], 1

</llo_original>
